<compile_context>
chip_gen: v6e
topology: v6e:2x2x1
jax: 0.10.0
libtpu: 0.0.40
codegen_flags: <defaults>
</compile_context>

<pallas_src>
import functools
import math

import jax
import jax.numpy as jnp
from jax.experimental import pallas as pl
from jax.experimental.pallas import tpu as pltpu


def _round_up(x, m):
    return ((x + m - 1) // m) * m


def _ri_mlp_kernel(x_ref, *refs, num_layers, num_offsets, tm, pooling):
    # refs = [w1_stack, b1, w2, b2, ..., out_ref]
    wb_refs = refs[: 2 * num_layers]
    o_ref = refs[2 * num_layers]

    x = x_ref[...].astype(jnp.float32)  # (tm, in_features)

    # Layer 1: per-offset matmuls against pre-rolled weights, stacked along the
    # row (sublane) axis -> (num_offsets * tm, h1).
    w1_ref, b1_ref = wb_refs[0], wb_refs[1]
    b1 = b1_ref[...].astype(jnp.float32)  # (1, h1)
    h = jnp.concatenate(
        [
            jnp.dot(
                x,
                w1_ref[o].astype(jnp.float32),
                preferred_element_type=jnp.float32,
            )
            for o in range(num_offsets)
        ],
        axis=0,
    )
    h = jnp.maximum(h + b1, 0.0)

    # Remaining layers: one fat (num_offsets*tm, K) x (K, N) matmul each.
    for layer in range(1, num_layers):
        w = wb_refs[2 * layer][...].astype(jnp.float32)
        b = wb_refs[2 * layer + 1][...].astype(jnp.float32)
        h = jnp.maximum(
            jnp.dot(h, w, preferred_element_type=jnp.float32) + b, 0.0
        )

    # Pool over offsets: row groups [o*tm, (o+1)*tm).
    pooled = h[0:tm]
    for o in range(1, num_offsets):
        part = h[o * tm : (o + 1) * tm]
        if pooling == "mean":
            pooled = pooled + part
        else:
            pooled = jnp.maximum(pooled, part)
    if pooling == "mean":
        pooled = pooled * (1.0 / num_offsets)

    o_ref[...] = pooled.astype(o_ref.dtype)


def rotation_invariant_mlp(x, params, *, offsets=(-1, 0, 1), pooling="mean", tm=512):
    """x: (T, N, C, ...) float32; params: [w1,b1,w2,b2,...] with w:(in,out), b:(1,out)."""
    assert pooling in ("mean", "max")
    offs = tuple(offsets) if len(offsets) > 0 else (0,)
    num_offsets = len(offs)

    T, N, C = x.shape[0], x.shape[1], x.shape[2]
    in_features = math.prod(x.shape[2:])
    feats_per_channel = in_features // C
    M = T * N

    num_layers = len(params) // 2
    out_features = params[-2].shape[-1]
    out_padded = _round_up(out_features, 128)  # lane-dense output stores

    # Fold the electrode roll into the first layer's weights:
    #   roll(x, s) @ W == x @ roll(W, -s, axis=0), s = offset * feats_per_channel.
    kparams = list(params)
    kparams[0] = jnp.stack(
        [jnp.roll(params[0], -(o * feats_per_channel), axis=0) for o in offs],
        axis=0,
    )  # (num_offsets, in_features, h1)

    # Zero-pad the final layer's outputs to the lane width (sliced away outside).
    pad = out_padded - out_features
    if pad:
        w_last = kparams[-2]
        kparams[-2] = jnp.pad(w_last, [(0, 0)] * (w_last.ndim - 1) + [(0, pad)])
        kparams[-1] = jnp.pad(kparams[-1], ((0, 0), (0, pad)))

    # Flatten rows; pad M so it divides the row tile (keeps (8,128) rules happy).
    x2d = x.reshape(M, in_features)
    tm = min(tm, _round_up(M, 8))
    M_pad = _round_up(M, tm)
    if M_pad != M:
        x2d = jnp.pad(x2d, ((0, M_pad - M), (0, 0)))

    kernel = functools.partial(
        _ri_mlp_kernel,
        num_layers=num_layers,
        num_offsets=num_offsets,
        tm=tm,
        pooling=pooling,
    )

    # Weights/biases are tiny: each is one full block, resident across all steps
    # (constant index_map => Pallas skips re-DMA between grid steps).
    wb_specs = [
        pl.BlockSpec(p.shape, lambda i, nd=p.ndim: (0,) * nd) for p in kparams
    ]

    out = pl.pallas_call(
        kernel,
        out_shape=jax.ShapeDtypeStruct((M_pad, out_padded), x.dtype),
        grid_spec=pltpu.PrefetchScalarGridSpec(
            num_scalar_prefetch=0,
            grid=(M_pad // tm,),  # row tiles only; no reduction axis
            in_specs=[pl.BlockSpec((tm, in_features), lambda i: (i, 0))]
            + wb_specs,
            out_specs=pl.BlockSpec((tm, out_padded), lambda i: (i, 0)),
        ),
        compiler_params=pltpu.CompilerParams(
            dimension_semantics=("parallel",),  # megacore-shard row tiles (v7x)
            vmem_limit_bytes=32 * 1024 * 1024,
        ),
    )(x2d, *kparams)

    return out[:M, :out_features].reshape(T, N, out_features)


def init_params(key, in_features, mlp_features):
    """Deterministic nn.Linear-style init (uniform +/- 1/sqrt(fan_in))."""
    params = []
    fan_in = in_features
    for out_f in mlp_features:
        key, wk, bk = jax.random.split(key, 3)
        bound = 1.0 / math.sqrt(fan_in)
        w = jax.random.uniform(wk, (fan_in, out_f), jnp.float32, -bound, bound)
        b = jax.random.uniform(bk, (1, out_f), jnp.float32, -bound, bound)
        params += [w, b]
        fan_in = out_f
    return params


def reference(x, params, *, offsets=(-1, 0, 1), pooling="mean"):
    """Pure-JAX reference matching the PyTorch forward."""
    offs = tuple(offsets) if len(offsets) > 0 else (0,)
    T, N = x.shape[0], x.shape[1]
    in_features = math.prod(x.shape[2:])
    xs = jnp.stack([jnp.roll(x, o, axis=2) for o in offs], axis=2)  # (T,N,O,C,...)
    h = xs.reshape(T, N, len(offs), in_features)
    for layer in range(len(params) // 2):
        w, b = params[2 * layer], params[2 * layer + 1]
        h = jnp.maximum(h @ w + b[0], 0.0)
    if pooling == "max":
        return h.max(axis=2)
    return h.mean(axis=2)


if __name__ == "__main__":
    key = jax.random.PRNGKey(0)
    # Small shapes implied by the forward: (T, N, electrode_channels, freq)
    T, N, C, F = 8, 2, 4, 4
    mlp_features = (32, 32)
    offsets = (-1, 0, 1)

    xkey, pkey = jax.random.split(key)
    x = jax.random.normal(xkey, (T, N, C, F), jnp.float32)
    params = init_params(pkey, C * F, mlp_features)

    ok = True
    for pooling in ("mean", "max"):
        out = rotation_invariant_mlp(x, params, offsets=offsets, pooling=pooling)
        out = jax.block_until_ready(out)
        ref = reference(x, params, offsets=offsets, pooling=pooling)
        ok &= out.shape == (T, N, mlp_features[-1])
        ok &= bool(jnp.allclose(out, ref, atol=1e-5, rtol=1e-5))

    assert ok, "mismatch vs reference"
    print("KERNEL_OK")
</pallas_src>

<mosaic_0001>
module attributes {stable_mosaic.version = 11 : i64} {
  func.func @_ri_mlp_kernel(%arg0: i32, %arg1: memref<16x16xf32, #tpu.memory_space<vmem>>, %arg2: memref<3x16x32xf32, #tpu.memory_space<vmem>>, %arg3: memref<1x32xf32, #tpu.memory_space<vmem>>, %arg4: memref<32x128xf32, #tpu.memory_space<vmem>>, %arg5: memref<1x128xf32, #tpu.memory_space<vmem>>, %arg6: memref<16x128xf32, #tpu.memory_space<vmem>>) attributes {dimension_semantics = [#tpu.dimension_semantics<parallel>], iteration_bounds = array<i64: 1>, scalar_prefetch = 0 : i64, scratch_operands = 0 : i64, tpu.core_type = #tpu.core_type<tc>, window_params = [{transform_indices = @transform_0, window_bounds = array<i64: 16, 16>}, {pipeline_mode = #tpu.pipeline_mode<synchronous>, transform_indices = @transform_1, window_bounds = array<i64: 3, 16, 32>}, {pipeline_mode = #tpu.pipeline_mode<synchronous>, transform_indices = @transform_2, window_bounds = array<i64: 1, 32>}, {pipeline_mode = #tpu.pipeline_mode<synchronous>, transform_indices = @transform_3, window_bounds = array<i64: 32, 128>}, {pipeline_mode = #tpu.pipeline_mode<synchronous>, transform_indices = @transform_4, window_bounds = array<i64: 1, 128>}, {transform_indices = @transform_5, window_bounds = array<i64: 16, 128>}]} {
    %c0 = arith.constant 0 : index
    %c0_0 = arith.constant 0 : index
    %0 = vector.load %arg1[%c0, %c0_0] : memref<16x16xf32, #tpu.memory_space<vmem>>, vector<16x16xf32>
    %c0_1 = arith.constant 0 : index
    %c0_2 = arith.constant 0 : index
    %1 = vector.load %arg3[%c0_1, %c0_2] : memref<1x32xf32, #tpu.memory_space<vmem>>, vector<1x32xf32>
    %c0_3 = arith.constant 0 : index
    %c0_4 = arith.constant 0 : index
    %c0_5 = arith.constant 0 : index
    %2 = vector.load %arg2[%c0_3, %c0_4, %c0_5] : memref<3x16x32xf32, #tpu.memory_space<vmem>>, vector<1x16x32xf32>
    %3 = vector.shape_cast %2 : vector<1x16x32xf32> to vector<16x32xf32>
    %cst = arith.constant dense<0.000000e+00> : vector<16x32xf32>
    %4 = tpu.matmul %0, %3, %cst {dimension_numbers = #tpu.dot_dimension_numbers<[1], [0], [0], [1], [0, 0, 1, 1], [], []>} : vector<16x16xf32>, vector<16x32xf32>, vector<16x32xf32> -> vector<16x32xf32>
    %c1 = arith.constant 1 : index
    %c0_6 = arith.constant 0 : index
    %c0_7 = arith.constant 0 : index
    %5 = vector.load %arg2[%c1, %c0_6, %c0_7] : memref<3x16x32xf32, #tpu.memory_space<vmem>>, vector<1x16x32xf32>
    %6 = vector.shape_cast %5 : vector<1x16x32xf32> to vector<16x32xf32>
    %cst_8 = arith.constant dense<0.000000e+00> : vector<16x32xf32>
    %7 = tpu.matmul %0, %6, %cst_8 {dimension_numbers = #tpu.dot_dimension_numbers<[1], [0], [0], [1], [0, 0, 1, 1], [], []>} : vector<16x16xf32>, vector<16x32xf32>, vector<16x32xf32> -> vector<16x32xf32>
    %c2 = arith.constant 2 : index
    %c0_9 = arith.constant 0 : index
    %c0_10 = arith.constant 0 : index
    %8 = vector.load %arg2[%c2, %c0_9, %c0_10] : memref<3x16x32xf32, #tpu.memory_space<vmem>>, vector<1x16x32xf32>
    %9 = vector.shape_cast %8 : vector<1x16x32xf32> to vector<16x32xf32>
    %cst_11 = arith.constant dense<0.000000e+00> : vector<16x32xf32>
    %10 = tpu.matmul %0, %9, %cst_11 {dimension_numbers = #tpu.dot_dimension_numbers<[1], [0], [0], [1], [0, 0, 1, 1], [], []>} : vector<16x16xf32>, vector<16x32xf32>, vector<16x32xf32> -> vector<16x32xf32>
    %11 = tpu.concatenate %4, %7, %10 in 0 : vector<16x32xf32>, vector<16x32xf32>, vector<16x32xf32> -> vector<48x32xf32>
    %12 = vector.broadcast %1 : vector<1x32xf32> to vector<48x32xf32>
    %13 = arith.addf %11, %12 : vector<48x32xf32>
    %cst_12 = arith.constant 0.000000e+00 : f32
    %14 = vector.broadcast %cst_12 : f32 to vector<48x32xf32>
    %15 = arith.maximumf %13, %14 : vector<48x32xf32>
    %c0_13 = arith.constant 0 : index
    %c0_14 = arith.constant 0 : index
    %16 = vector.load %arg4[%c0_13, %c0_14] : memref<32x128xf32, #tpu.memory_space<vmem>>, vector<32x128xf32>
    %c0_15 = arith.constant 0 : index
    %c0_16 = arith.constant 0 : index
    %17 = vector.load %arg5[%c0_15, %c0_16] : memref<1x128xf32, #tpu.memory_space<vmem>>, vector<1x128xf32>
    %cst_17 = arith.constant dense<0.000000e+00> : vector<48x128xf32>
    %18 = tpu.matmul %15, %16, %cst_17 {dimension_numbers = #tpu.dot_dimension_numbers<[1], [0], [0], [1], [0, 0, 1, 1], [], []>} : vector<48x32xf32>, vector<32x128xf32>, vector<48x128xf32> -> vector<48x128xf32>
    %19 = vector.broadcast %17 : vector<1x128xf32> to vector<48x128xf32>
    %20 = arith.addf %18, %19 : vector<48x128xf32>
    %cst_18 = arith.constant 0.000000e+00 : f32
    %21 = vector.broadcast %cst_18 : f32 to vector<48x128xf32>
    %22 = arith.maximumf %20, %21 : vector<48x128xf32>
    %23 = vector.extract_strided_slice %22 {offsets = [0, 0], sizes = [16, 128], strides = [1, 1]} : vector<48x128xf32> to vector<16x128xf32>
    %24 = vector.extract_strided_slice %22 {offsets = [16, 0], sizes = [16, 128], strides = [1, 1]} : vector<48x128xf32> to vector<16x128xf32>
    %25 = arith.addf %23, %24 : vector<16x128xf32>
    %26 = vector.extract_strided_slice %22 {offsets = [32, 0], sizes = [16, 128], strides = [1, 1]} : vector<48x128xf32> to vector<16x128xf32>
    %27 = arith.addf %25, %26 : vector<16x128xf32>
    %cst_19 = arith.constant 0.333333343 : f32
    %28 = vector.broadcast %cst_19 : f32 to vector<16x128xf32>
    %29 = arith.mulf %27, %28 : vector<16x128xf32>
    %c0_20 = arith.constant 0 : index
    %c0_21 = arith.constant 0 : index
    %30 = vector.load %arg6[%c0_20, %c0_21] : memref<16x128xf32, #tpu.memory_space<vmem>>, vector<16x128xf32>
    tpu.vector_store %arg6[%c0_20, %c0_21], %29 {strides = array<i32>} : memref<16x128xf32, #tpu.memory_space<vmem>>, vector<16x128xf32>,
    return
  }
  func.func @transform_0(%arg0: i32) -> (i32, i32) {
    %c0_i32 = arith.constant 0 : i32
    %c0_i32_0 = arith.constant 0 : i32
    return %arg0, %c0_i32 : i32, i32
  }
  func.func @transform_1(%arg0: i32) -> (i32, i32, i32) {
    %c0_i32 = arith.constant 0 : i32
    %c0_i32_0 = arith.constant 0 : i32
    %c0_i32_1 = arith.constant 0 : i32
    %c0_i32_2 = arith.constant 0 : i32
    return %c0_i32, %c0_i32_0, %c0_i32_1 : i32, i32, i32
  }
  func.func @transform_2(%arg0: i32) -> (i32, i32) {
    %c0_i32 = arith.constant 0 : i32
    %c0_i32_0 = arith.constant 0 : i32
    %c0_i32_1 = arith.constant 0 : i32
    return %c0_i32, %c0_i32_0 : i32, i32
  }
  func.func @transform_3(%arg0: i32) -> (i32, i32) {
    %c0_i32 = arith.constant 0 : i32
    %c0_i32_0 = arith.constant 0 : i32
    %c0_i32_1 = arith.constant 0 : i32
    return %c0_i32, %c0_i32_0 : i32, i32
  }
  func.func @transform_4(%arg0: i32) -> (i32, i32) {
    %c0_i32 = arith.constant 0 : i32
    %c0_i32_0 = arith.constant 0 : i32
    %c0_i32_1 = arith.constant 0 : i32
    return %c0_i32, %c0_i32_0 : i32, i32
  }
  func.func @transform_5(%arg0: i32) -> (i32, i32) {
    %c0_i32 = arith.constant 0 : i32
    %c0_i32_0 = arith.constant 0 : i32
    return %arg0, %c0_i32 : i32, i32
  }
}

</mosaic_0001>

<llo_original>
// kernel: tpu_custom_call.1
$region0: #{tpu_custom_call.1}
  #allocation0 [shape = 'u32[]', space=smem, size = 0x4, offset = 0x4, fixed_abs, tag = 'smem constant byte address 0x4 - core index']
  #allocation1 [shape = 'u32[144,128]{1,0:T(1,128)}', space=vmem, size = 0x12000, scoped, tag = 'internal scratch']
  %s0 = inlined_call_operand.hbm [shape: f32[16,16], index: 0, kind: input, shape index: {}]
  %s1 = inlined_call_operand.hbm [shape: f32[3,16,32], index: 1, kind: input, shape index: {}]
  %s2 = inlined_call_operand.vmem [shape: f32[1,32], index: 2, kind: input, shape index: {}]
  %s3 = inlined_call_operand.hbm [shape: f32[32,128], index: 3, kind: input, shape index: {}]
  %s4 = inlined_call_operand.vmem [shape: f32[1,128], index: 4, kind: input, shape index: {}]
  %s5 = inlined_call_operand.hbm [shape: f32[16,128], index: 5, kind: output, shape index: {}]
  %s6 = sld [smem:[#allocation0]]
  $region42: #{tpu_custom_call.1} parent=0
    _
  %s8 = ssub.s32 1, %s6
  %s9 = scalar_select 0, %s8, %s6
  $region1: #{tpu_custom_call.1} parent=0
    #allocation2 [shape = 'u8[8192]{0}', space=vmem, size = 0x2000, scoped, tag = 'input window, operand 0, single buffered']
    #allocation3 [shape = 's32[1]{0}', space=sflag, size = 0x4, scoped, tag = 'scoped memory for tpu_custom_call.1']
    #allocation4 [shape = 's32[1]{0}', space=sflag, size = 0x4, scoped, tag = 'scoped memory for tpu_custom_call.1']
    #allocation5 [shape = 'u8[24576]{0}', space=vmem, size = 0x6000, scoped, tag = 'input window, operand 1, single buffered']
    #allocation6 [shape = 's32[1]{0}', space=sflag, size = 0x4, scoped, tag = 'scoped memory for tpu_custom_call.1']
    #allocation7 [shape = 'u8[16384]{0}', space=vmem, size = 0x4000, scoped, tag = 'input window, operand 3, single buffered']
    #allocation8 [shape = 'u8[8192]{0}', space=vmem, size = 0x2000, scoped, tag = 'output window, operand 0, single buffered']
    %10 = vsyncpa [#allocation3], 0
    %11 = vsyncpa [#allocation6], 0
    %12 = vsyncpa [#allocation4], 0
    // Predicated region
    $region2: #{tpu_custom_call.1} parent=1 // pred_check
      _
    $region3: #{tpu_custom_call.1} parent=1 // pred_check_branch
      %14 = sbr.rel (0) target = $region5
    $region4: #{tpu_custom_call.1} parent=1 // pred_region
      %s16 = ssub.s32 256, 256
      %17 = vsyncadd [#allocation3], %s16
      %s18 = sshll.u32 [#allocation2], 4
      %s19 = int_to_ptr.vmem [resolvable:$true] %s18
      %24 = dma.hbm_to_vmem [thread:$0]  %s0, 256, %s19, [#allocation3], 128, 128, 8
    $region5: #{tpu_custom_call.1} parent=1 // pred_fallthru
      _
    // Predicated region
    $region6: #{tpu_custom_call.1} parent=1 // pred_check
      _
    $region7: #{tpu_custom_call.1} parent=1 // pred_check_branch
      %26 = sbr.rel (0) target = $region9
    $region8: #{tpu_custom_call.1} parent=1 // pred_region
      %s28 = ssub.s32 768, 768
      %29 = vsyncadd [#allocation6], %s28
      %s30 = sshll.u32 [#allocation5], 4
      %s31 = int_to_ptr.vmem [resolvable:$true] %s30
      %36 = dma.hbm_to_vmem [thread:$0]  %s1, 768, %s31, [#allocation6], 128, 128, 8
    $region9: #{tpu_custom_call.1} parent=1 // pred_fallthru
      _
    // Predicated region
    $region10: #{tpu_custom_call.1} parent=1 // pred_check
      _
    $region11: #{tpu_custom_call.1} parent=1 // pred_check_branch
      %38 = sbr.rel (0) target = $region13
    $region12: #{tpu_custom_call.1} parent=1 // pred_region
      _
    $region13: #{tpu_custom_call.1} parent=1 // pred_fallthru
      _
    // Predicated region
    $region14: #{tpu_custom_call.1} parent=1 // pred_check
      _
    $region15: #{tpu_custom_call.1} parent=1 // pred_check_branch
      %40 = sbr.rel (0) target = $region17
    $region16: #{tpu_custom_call.1} parent=1 // pred_region
      %s42 = ssub.s32 512, 512
      %43 = vsyncadd [#allocation6], %s42
      %s44 = sshll.u32 [#allocation7], 4
      %s45 = int_to_ptr.vmem [resolvable:$true] %s44
      %50 = dma.hbm_to_vmem [thread:$0]  %s3, 512, %s45, [#allocation6], 128, 128, 8
    $region17: #{tpu_custom_call.1} parent=1 // pred_fallthru
      _
    // Predicated region
    $region18: #{tpu_custom_call.1} parent=1 // pred_check
      _
    $region19: #{tpu_custom_call.1} parent=1 // pred_check_branch
      %52 = sbr.rel (0) target = $region21
    $region20: #{tpu_custom_call.1} parent=1 // pred_region
      _
    $region21: #{tpu_custom_call.1} parent=1 // pred_fallthru
      _
    // Predicated region
    $region22: #{tpu_custom_call.1} parent=1 // pred_check
      _
    $region23: #{tpu_custom_call.1} parent=1 // pred_check_branch
      %54 = sbr.rel (0) target = $region25
    $region24: #{tpu_custom_call.1} parent=1 // pred_region
      %55 = dma.done [#allocation3], 256
    $region25: #{tpu_custom_call.1} parent=1 // pred_fallthru
      _
    // Predicated region
    $region26: #{tpu_custom_call.1} parent=1 // pred_check
      _
    $region27: #{tpu_custom_call.1} parent=1 // pred_check_branch
      %57 = sbr.rel (0) target = $region29
    $region28: #{tpu_custom_call.1} parent=1 // pred_region
      %58 = dma.done [#allocation6], 768
    $region29: #{tpu_custom_call.1} parent=1 // pred_fallthru
      _
    // Predicated region
    $region30: #{tpu_custom_call.1} parent=1 // pred_check
      _
    $region31: #{tpu_custom_call.1} parent=1 // pred_check_branch
      %60 = sbr.rel (0) target = $region33
    $region32: #{tpu_custom_call.1} parent=1 // pred_region
      %61 = dma.done [#allocation6], 512
    $region33: #{tpu_custom_call.1} parent=1 // pred_fallthru
      _
    %v62 = vld [vmem:[#allocation2] sm:$0xff]
    %v63 = vld [vmem:[#allocation2 + $0x8] sm:$0xff]
    %v64 = vld [vmem:[%s2] sm:$0x1]
    %v65 = vld [vmem:[#allocation5] sm:$0xff]
    %v66 = vld [vmem:[#allocation5 + $0x8] sm:$0xff]
    %vm67 = vcmask 130048
    %v69 = vsel %vm67, %v62, 0
    %v72 = vsel %vm67, %v63, 0
    %74 = vmatprep.subr.mxu0 0.0
    %75 = vmatpush1.msra.mxu0 0.0
    %76 = vmatprep.subr.mxu0 0.0
    %77 = vmatpush1.msra.mxu0 0.0
    %78 = vmatprep.subr.mxu0 0.0
    %79 = vmatpush1.msra.mxu0 0.0
    %80 = vmatprep.subr.mxu0 0.0
    %81 = vmatpush1.msra.mxu0 0.0
    %82 = vmatprep.subr.mxu0 0.0
    %83 = vmatpush1.msra.mxu0 0.0
    %84 = vmatprep.subr.mxu0 0.0
    %85 = vmatpush1.msra.mxu0 0.0
    %86 = vmatprep.subr.mxu0 0.0
    %87 = vmatpush1.msra.mxu0 0.0
    %88 = vmatprep.subr.mxu0 0.0
    %89 = vmatpush1.msra.mxu0 0.0
    %90 = vmatprep.subr.mxu0 0.0
    %91 = vmatpush1.msra.mxu0 0.0
    %92 = vmatprep.subr.mxu0 0.0
    %93 = vmatpush1.msra.mxu0 0.0
    %94 = vmatprep.subr.mxu0 0.0
    %95 = vmatpush1.msra.mxu0 0.0
    %96 = vmatprep.subr.mxu0 0.0
    %97 = vmatpush1.msra.mxu0 0.0
    %98 = vmatprep.subr.mxu0 0.0
    %99 = vmatpush1.msra.mxu0 0.0
    %100 = vmatprep.subr.mxu0 0.0
    %101 = vmatpush1.msra.mxu0 0.0
    %102 = vmatprep.subr.mxu0 0.0
    %103 = vmatpush1.msra.mxu0 %v66
    %104 = vmatprep.subr.mxu0 0.0
    %105 = vmatpush1.msra.mxu0 %v65
    %106 = vmatprep.subr.mxu0 0.0
    %107 = vmatpush2.msra.mxu0 0.0
    %108 = vmatprep.subr.mxu0 0.0
    %109 = vmatpush2.msra.mxu0 0.0
    %110 = vmatprep.subr.mxu0 0.0
    %111 = vmatpush2.msra.mxu0 0.0
    %112 = vmatprep.subr.mxu0 0.0
    %113 = vmatpush2.msra.mxu0 0.0
    %114 = vmatprep.subr.mxu0 0.0
    %115 = vmatpush2.msra.mxu0 0.0
    %116 = vmatprep.subr.mxu0 0.0
    %117 = vmatpush2.msra.mxu0 0.0
    %118 = vmatprep.subr.mxu0 0.0
    %119 = vmatpush2.msra.mxu0 0.0
    %120 = vmatprep.subr.mxu0 0.0
    %121 = vmatpush2.msra.mxu0 0.0
    %122 = vmatprep.subr.mxu0 0.0
    %123 = vmatpush2.msra.mxu0 0.0
    %124 = vmatprep.subr.mxu0 0.0
    %125 = vmatpush2.msra.mxu0 0.0
    %126 = vmatprep.subr.mxu0 0.0
    %127 = vmatpush2.msra.mxu0 0.0
    %128 = vmatprep.subr.mxu0 0.0
    %129 = vmatpush2.msra.mxu0 0.0
    %130 = vmatprep.subr.mxu0 0.0
    %131 = vmatpush2.msra.mxu0 0.0
    %132 = vmatprep.subr.mxu0 0.0
    %133 = vmatpush2.msra.mxu0 0.0
    %134 = vmatprep.subr.mxu0 0.0
    %135 = vmatpush2.msra.mxu0 0.0
    %136 = vmatprep.subr.mxu0 0.0
    %137 = vmatpush2.msra.mxu0 0.0
    %138 = vmatprep.mubr.f32.mxu0 0.0
    %139 = vmatmul.mubr.f32.gmra.mxu0 %v69
    %v140 = vpop.f32.mrf.mxu0
    %v141 = vadd.f32 0.0, %v140
    %v142 = vpop.f32.mrf.mxu0
    %143 = vmatprep.mubr.f32.mxu0 0.0
    %144 = vmatmul.mubr.f32.gmra.mxu0 %v72
    %v145 = vpop.f32.mrf.mxu0
    %v146 = vadd.f32 0.0, %v145
    %v147 = vpop.f32.mrf.mxu0
    %148 = vdwg.mxu0
    %s149 = scalar_lea.vmem [#allocation5], 16
    %v150 = vld [vmem:[%s149] sm:$0xff]
    %v151 = vld [vmem:[%s149 + $0x8] sm:$0xff]
    %152 = vmatprep.subr.mxu0 0.0
    %153 = vmatpush1.msra.mxu0 0.0
    %154 = vmatprep.subr.mxu0 0.0
    %155 = vmatpush1.msra.mxu0 0.0
    %156 = vmatprep.subr.mxu0 0.0
    %157 = vmatpush1.msra.mxu0 0.0
    %158 = vmatprep.subr.mxu0 0.0
    %159 = vmatpush1.msra.mxu0 0.0
    %160 = vmatprep.subr.mxu0 0.0
    %161 = vmatpush1.msra.mxu0 0.0
    %162 = vmatprep.subr.mxu0 0.0
    %163 = vmatpush1.msra.mxu0 0.0
    %164 = vmatprep.subr.mxu0 0.0
    %165 = vmatpush1.msra.mxu0 0.0
    %166 = vmatprep.subr.mxu0 0.0
    %167 = vmatpush1.msra.mxu0 0.0
    %168 = vmatprep.subr.mxu0 0.0
    %169 = vmatpush1.msra.mxu0 0.0
    %170 = vmatprep.subr.mxu0 0.0
    %171 = vmatpush1.msra.mxu0 0.0
    %172 = vmatprep.subr.mxu0 0.0
    %173 = vmatpush1.msra.mxu0 0.0
    %174 = vmatprep.subr.mxu0 0.0
    %175 = vmatpush1.msra.mxu0 0.0
    %176 = vmatprep.subr.mxu0 0.0
    %177 = vmatpush1.msra.mxu0 0.0
    %178 = vmatprep.subr.mxu0 0.0
    %179 = vmatpush1.msra.mxu0 0.0
    %180 = vmatprep.subr.mxu0 0.0
    %181 = vmatpush1.msra.mxu0 %v151
    %182 = vmatprep.subr.mxu0 0.0
    %183 = vmatpush1.msra.mxu0 %v150
    %184 = vmatprep.subr.mxu0 0.0
    %185 = vmatpush2.msra.mxu0 0.0
    %186 = vmatprep.subr.mxu0 0.0
    %187 = vmatpush2.msra.mxu0 0.0
    %188 = vmatprep.subr.mxu0 0.0
    %189 = vmatpush2.msra.mxu0 0.0
    %190 = vmatprep.subr.mxu0 0.0
    %191 = vmatpush2.msra.mxu0 0.0
    %192 = vmatprep.subr.mxu0 0.0
    %193 = vmatpush2.msra.mxu0 0.0
    %194 = vmatprep.subr.mxu0 0.0
    %195 = vmatpush2.msra.mxu0 0.0
    %196 = vmatprep.subr.mxu0 0.0
    %197 = vmatpush2.msra.mxu0 0.0
    %198 = vmatprep.subr.mxu0 0.0
    %199 = vmatpush2.msra.mxu0 0.0
    %200 = vmatprep.subr.mxu0 0.0
    %201 = vmatpush2.msra.mxu0 0.0
    %202 = vmatprep.subr.mxu0 0.0
    %203 = vmatpush2.msra.mxu0 0.0
    %204 = vmatprep.subr.mxu0 0.0
    %205 = vmatpush2.msra.mxu0 0.0
    %206 = vmatprep.subr.mxu0 0.0
    %207 = vmatpush2.msra.mxu0 0.0
    %208 = vmatprep.subr.mxu0 0.0
    %209 = vmatpush2.msra.mxu0 0.0
    %210 = vmatprep.subr.mxu0 0.0
    %211 = vmatpush2.msra.mxu0 0.0
    %212 = vmatprep.subr.mxu0 0.0
    %213 = vmatpush2.msra.mxu0 0.0
    %214 = vmatprep.subr.mxu0 0.0
    %215 = vmatpush2.msra.mxu0 0.0
    %216 = vmatprep.mubr.f32.mxu0 0.0
    %217 = vmatmul.mubr.f32.gmra.mxu0 %v69
    %v218 = vpop.f32.mrf.mxu0
    %v219 = vadd.f32 0.0, %v218
    %v220 = vpop.f32.mrf.mxu0
    %221 = vmatprep.mubr.f32.mxu0 0.0
    %222 = vmatmul.mubr.f32.gmra.mxu0 %v72
    %v223 = vpop.f32.mrf.mxu0
    %v224 = vadd.f32 0.0, %v223
    %v225 = vpop.f32.mrf.mxu0
    %226 = vdwg.mxu0
    %s227 = scalar_lea.vmem [#allocation5], 32
    %v228 = vld [vmem:[%s227] sm:$0xff]
    %v229 = vld [vmem:[%s227 + $0x8] sm:$0xff]
    %230 = vmatprep.subr.mxu0 0.0
    %231 = vmatpush1.msra.mxu0 0.0
    %232 = vmatprep.subr.mxu0 0.0
    %233 = vmatpush1.msra.mxu0 0.0
    %234 = vmatprep.subr.mxu0 0.0
    %235 = vmatpush1.msra.mxu0 0.0
    %236 = vmatprep.subr.mxu0 0.0
    %237 = vmatpush1.msra.mxu0 0.0
    %238 = vmatprep.subr.mxu0 0.0
    %239 = vmatpush1.msra.mxu0 0.0
    %240 = vmatprep.subr.mxu0 0.0
    %241 = vmatpush1.msra.mxu0 0.0
    %242 = vmatprep.subr.mxu0 0.0
    %243 = vmatpush1.msra.mxu0 0.0
    %244 = vmatprep.subr.mxu0 0.0
    %245 = vmatpush1.msra.mxu0 0.0
    %246 = vmatprep.subr.mxu0 0.0
    %247 = vmatpush1.msra.mxu0 0.0
    %248 = vmatprep.subr.mxu0 0.0
    %249 = vmatpush1.msra.mxu0 0.0
    %250 = vmatprep.subr.mxu0 0.0
    %251 = vmatpush1.msra.mxu0 0.0
    %252 = vmatprep.subr.mxu0 0.0
    %253 = vmatpush1.msra.mxu0 0.0
    %254 = vmatprep.subr.mxu0 0.0
    %255 = vmatpush1.msra.mxu0 0.0
    %256 = vmatprep.subr.mxu0 0.0
    %257 = vmatpush1.msra.mxu0 0.0
    %258 = vmatprep.subr.mxu0 0.0
    %259 = vmatpush1.msra.mxu0 %v229
    %260 = vmatprep.subr.mxu0 0.0
    %261 = vmatpush1.msra.mxu0 %v228
    %262 = vmatprep.subr.mxu0 0.0
    %263 = vmatpush2.msra.mxu0 0.0
    %264 = vmatprep.subr.mxu0 0.0
    %265 = vmatpush2.msra.mxu0 0.0
    %266 = vmatprep.subr.mxu0 0.0
    %267 = vmatpush2.msra.mxu0 0.0
    %268 = vmatprep.subr.mxu0 0.0
    %269 = vmatpush2.msra.mxu0 0.0
    %270 = vmatprep.subr.mxu0 0.0
    %271 = vmatpush2.msra.mxu0 0.0
    %272 = vmatprep.subr.mxu0 0.0
    %273 = vmatpush2.msra.mxu0 0.0
    %274 = vmatprep.subr.mxu0 0.0
    %275 = vmatpush2.msra.mxu0 0.0
    %276 = vmatprep.subr.mxu0 0.0
    %277 = vmatpush2.msra.mxu0 0.0
    %278 = vmatprep.subr.mxu0 0.0
    %279 = vmatpush2.msra.mxu0 0.0
    %280 = vmatprep.subr.mxu0 0.0
    %281 = vmatpush2.msra.mxu0 0.0
    %282 = vmatprep.subr.mxu0 0.0
    %283 = vmatpush2.msra.mxu0 0.0
    %284 = vmatprep.subr.mxu0 0.0
    %285 = vmatpush2.msra.mxu0 0.0
    %286 = vmatprep.subr.mxu0 0.0
    %287 = vmatpush2.msra.mxu0 0.0
    %288 = vmatprep.subr.mxu0 0.0
    %289 = vmatpush2.msra.mxu0 0.0
    %290 = vmatprep.subr.mxu0 0.0
    %291 = vmatpush2.msra.mxu0 0.0
    %292 = vmatprep.subr.mxu0 0.0
    %293 = vmatpush2.msra.mxu0 0.0
    %294 = vmatprep.mubr.f32.mxu0 0.0
    %295 = vmatmul.mubr.f32.gmra.mxu0 %v69
    %v296 = vpop.f32.mrf.mxu0
    %v297 = vadd.f32 0.0, %v296
    %v298 = vpop.f32.mrf.mxu0
    %299 = vmatprep.mubr.f32.mxu0 0.0
    %300 = vmatmul.mubr.f32.gmra.mxu0 %v72
    %v301 = vpop.f32.mrf.mxu0
    %v302 = vadd.f32 0.0, %v301
    %v303 = vpop.f32.mrf.mxu0
    %304 = vdwg.mxu0
    %v306 = vlaneseq
    %v307 = vshrl.u32 %v306, 7
    %v308 = vsub.s32 0, %v307
    %v309 = vrot.slane %v64, %v308
    %v311 = vadd.f32 %v141, %v309
    %v312 = vadd.f32 %v146, %v309
    %v313 = vadd.f32 %v219, %v309
    %v314 = vadd.f32 %v224, %v309
    %v315 = vadd.f32 %v297, %v309
    %v316 = vadd.f32 %v302, %v309
    %v317 = vmax.f32 %v311, 0.0
    %v318 = vmax.f32 %v312, 0.0
    %v319 = vmax.f32 %v313, 0.0
    %v320 = vmax.f32 %v314, 0.0
    %v321 = vmax.f32 %v315, 0.0
    %v322 = vmax.f32 %v316, 0.0
    %v323 = vld [vmem:[#allocation7] sm:$0xff]
    %v324 = vld [vmem:[#allocation7 + $0x8] sm:$0xff]
    %v325 = vld [vmem:[#allocation7 + $0x10] sm:$0xff]
    %v326 = vld [vmem:[#allocation7 + $0x18] sm:$0xff]
    %v327 = vld [vmem:[%s4] sm:$0x1]
    %v329 = vlaneseq
    %v330 = vshrl.u32 %v329, 7
    %v331 = vsub.s32 0, %v330
    %v332 = vrot.slane %v327, %v331
    %vm334 = vcmask 261120
    %v336 = vsel %vm334, %v317, 0
    %v339 = vsel %vm334, %v318, 0
    %v342 = vsel %vm334, %v319, 0
    %v345 = vsel %vm334, %v320, 0
    %v348 = vsel %vm334, %v321, 0
    %v351 = vsel %vm334, %v322, 0
    %353 = vmatprep.subr.mxu0 0.0
    %354 = vmatpush1.msra.mxu0 0.0
    %355 = vmatprep.subr.mxu0 0.0
    %356 = vmatpush1.msra.mxu0 0.0
    %357 = vmatprep.subr.mxu0 0.0
    %358 = vmatpush1.msra.mxu0 0.0
    %359 = vmatprep.subr.mxu0 0.0
    %360 = vmatpush1.msra.mxu0 0.0
    %361 = vmatprep.subr.mxu0 0.0
    %362 = vmatpush1.msra.mxu0 0.0
    %363 = vmatprep.subr.mxu0 0.0
    %364 = vmatpush1.msra.mxu0 0.0
    %365 = vmatprep.subr.mxu0 0.0
    %366 = vmatpush1.msra.mxu0 0.0
    %367 = vmatprep.subr.mxu0 0.0
    %368 = vmatpush1.msra.mxu0 0.0
    %369 = vmatprep.subr.mxu0 0.0
    %370 = vmatpush1.msra.mxu0 0.0
    %371 = vmatprep.subr.mxu0 0.0
    %372 = vmatpush1.msra.mxu0 0.0
    %373 = vmatprep.subr.mxu0 0.0
    %374 = vmatpush1.msra.mxu0 0.0
    %375 = vmatprep.subr.mxu0 0.0
    %376 = vmatpush1.msra.mxu0 0.0
    %377 = vmatprep.subr.mxu0 0.0
    %378 = vmatpush1.msra.mxu0 %v326
    %379 = vmatprep.subr.mxu0 0.0
    %380 = vmatpush1.msra.mxu0 %v325
    %381 = vmatprep.subr.mxu0 0.0
    %382 = vmatpush1.msra.mxu0 %v324
    %383 = vmatprep.subr.mxu0 0.0
    %384 = vmatpush1.msra.mxu0 %v323
    %385 = vmatprep.subr.mxu0 0.0
    %386 = vmatpush2.msra.mxu0 0.0
    %387 = vmatprep.subr.mxu0 0.0
    %388 = vmatpush2.msra.mxu0 0.0
    %389 = vmatprep.subr.mxu0 0.0
    %390 = vmatpush2.msra.mxu0 0.0
    %391 = vmatprep.subr.mxu0 0.0
    %392 = vmatpush2.msra.mxu0 0.0
    %393 = vmatprep.subr.mxu0 0.0
    %394 = vmatpush2.msra.mxu0 0.0
    %395 = vmatprep.subr.mxu0 0.0
    %396 = vmatpush2.msra.mxu0 0.0
    %397 = vmatprep.subr.mxu0 0.0
    %398 = vmatpush2.msra.mxu0 0.0
    %399 = vmatprep.subr.mxu0 0.0
    %400 = vmatpush2.msra.mxu0 0.0
    %401 = vmatprep.subr.mxu0 0.0
    %402 = vmatpush2.msra.mxu0 0.0
    %403 = vmatprep.subr.mxu0 0.0
    %404 = vmatpush2.msra.mxu0 0.0
    %405 = vmatprep.subr.mxu0 0.0
    %406 = vmatpush2.msra.mxu0 0.0
    %407 = vmatprep.subr.mxu0 0.0
    %408 = vmatpush2.msra.mxu0 0.0
    %409 = vmatprep.subr.mxu0 0.0
    %410 = vmatpush2.msra.mxu0 0.0
    %411 = vmatprep.subr.mxu0 0.0
    %412 = vmatpush2.msra.mxu0 0.0
    %413 = vmatprep.subr.mxu0 0.0
    %414 = vmatpush2.msra.mxu0 0.0
    %415 = vmatprep.subr.mxu0 0.0
    %416 = vmatpush2.msra.mxu0 0.0
    %417 = vmatprep.mubr.f32.mxu0 0.0
    %418 = vmatmul.mubr.f32.gmra.mxu0 %v336
    %v419 = vpop.f32.mrf.mxu0
    %v420 = vadd.f32 %v332, %v419
    %v421 = vpop.f32.mrf.mxu0
    %422 = vmatprep.mubr.f32.mxu0 0.0
    %423 = vmatmul.mubr.f32.gmra.mxu0 %v339
    %v424 = vpop.f32.mrf.mxu0
    %v425 = vadd.f32 %v332, %v424
    %v426 = vpop.f32.mrf.mxu0
    %427 = vmatprep.mubr.f32.mxu0 0.0
    %428 = vmatmul.mubr.f32.gmra.mxu0 %v342
    %v429 = vpop.f32.mrf.mxu0
    %v430 = vadd.f32 %v332, %v429
    %v431 = vpop.f32.mrf.mxu0
    %432 = vmatprep.mubr.f32.mxu0 0.0
    %433 = vmatmul.mubr.f32.gmra.mxu0 %v345
    %v434 = vpop.f32.mrf.mxu0
    %v435 = vadd.f32 %v332, %v434
    %v436 = vpop.f32.mrf.mxu0
    %437 = vmatprep.mubr.f32.mxu0 0.0
    %438 = vmatmul.mubr.f32.gmra.mxu0 %v348
    %v439 = vpop.f32.mrf.mxu0
    %v440 = vadd.f32 %v332, %v439
    %v441 = vpop.f32.mrf.mxu0
    %442 = vmatprep.mubr.f32.mxu0 0.0
    %443 = vmatmul.mubr.f32.gmra.mxu0 %v351
    %v444 = vpop.f32.mrf.mxu0
    %v445 = vadd.f32 %v332, %v444
    %v446 = vpop.f32.mrf.mxu0
    %447 = vdwg.mxu0
    %v448 = vmax.f32 %v420, 0.0
    %v449 = vmax.f32 %v425, 0.0
    %v450 = vmax.f32 %v430, 0.0
    %v451 = vmax.f32 %v435, 0.0
    %v452 = vmax.f32 %v440, 0.0
    %v453 = vmax.f32 %v445, 0.0
    %v454 = vadd.f32 %v448, %v450
    %v455 = vadd.f32 %v449, %v451
    %v456 = vadd.f32 %v454, %v452
    %v457 = vadd.f32 %v455, %v453
    %v458 = vmul.f32 %v456, 0.33333334
    %v459 = vmul.f32 %v457, 0.33333334
    %460 = vst [vmem:[#allocation8] sm:$0xff] %v458
    %461 = vst [vmem:[#allocation8 + $0x8] sm:$0xff] %v459
    // Predicated region
    $region34: #{tpu_custom_call.1} parent=1 // pred_check
      _
    $region35: #{tpu_custom_call.1} parent=1 // pred_check_branch
      %463 = sbr.rel (0) target = $region37
    $region36: #{tpu_custom_call.1} parent=1 // pred_region
      %s465 = ssub.s32 256, 256
      %466 = vsyncadd [#allocation4], %s465
      %s467 = sshll.u32 [#allocation8], 4
      %s468 = int_to_ptr.vmem [resolvable:$true] %s467
      %473 = dma.vmem_to_hbm [thread:$0]  %s468, 256, %s5, [#allocation4], 128, 128, 8
    $region37: #{tpu_custom_call.1} parent=1 // pred_fallthru
      _
    // Predicated region
    $region38: #{tpu_custom_call.1} parent=1 // pred_check
      _
    $region39: #{tpu_custom_call.1} parent=1 // pred_check_branch
      %475 = sbr.rel (0) target = $region41
    $region40: #{tpu_custom_call.1} parent=1 // pred_region
      %476 = dma.done [#allocation4], 256
    $region41: #{tpu_custom_call.1} parent=1 // pred_fallthru
      _
    %477 = vsyncpa [#allocation3], 1
    %478 = vsyncpa [#allocation6], 1
    %479 = vsyncpa [#allocation4], 1

</llo_original>
